<compile_context>
chip_gen: v7x
topology: tpu7x:2x2x1
jax: 0.10.0
libtpu: 0.0.40
codegen_flags: <defaults>
</compile_context>

<pallas_src>
import functools

import jax
import jax.numpy as jnp
import numpy as np
from jax.experimental import pallas as pl
from jax.experimental.pallas import tpu as pltpu


def _padding_kernel(x_ref, o_ref, *, num_pad):
    # x_ref: (T, tile_d)   o_ref: (T + num_pad - 1, tile_d)
    x = x_ref[...]
    npm1 = num_pad - 1
    if npm1 > 0:
        # Replicate row 0 (P-1) times, then emit one dense full-tile store.
        pad_rows = jnp.broadcast_to(x[0:1, :], (npm1, x.shape[1]))
        o_ref[...] = jnp.concatenate([pad_rows, x], axis=0)
    else:  # num_pad == 1: the torch loop body never runs -> identity copy
        o_ref[...] = x


def _pick_tile_d(d):
    """Largest lane-aligned feature tile that evenly divides d (else full d)."""
    if d % 128 != 0:
        return d  # must take the whole dim to satisfy the (8,128) layout rule
    for cand in (2048, 1024, 512, 256, 128):
        if cand <= d and d % cand == 0:
            return cand
    return d


def padding_forward(x, num_pad=3):
    """Pallas equivalent of padding(num_pad).forward for 3-D x = (B, T, D)."""
    assert x.ndim == 3, "kernel supports (batch, time, feature) inputs"
    assert num_pad >= 1, "num_pad must be >= 1"
    b, t, d = x.shape
    t_out = t + num_pad - 1
    tile_d = _pick_tile_d(d)
    grid = (b, d // tile_d)

    # Per-block VMEM working set (input + output, double buffered by Pallas).
    itemsize = jnp.dtype(x.dtype).itemsize
    block_bytes = (t + t_out) * tile_d * itemsize * 2
    vmem_limit = None
    if block_bytes > 24 * 1024 * 1024:  # only raise the limit when needed
        vmem_limit = min(100 * 1024 * 1024, int(block_bytes * 2))

    compiler_params = pltpu.CompilerParams(
        dimension_semantics=("parallel", "parallel"),
        vmem_limit_bytes=vmem_limit,
    )

    return pl.pallas_call(
        functools.partial(_padding_kernel, num_pad=num_pad),
        out_shape=jax.ShapeDtypeStruct((b, t_out, d), x.dtype),
        grid=grid,
        in_specs=[
            pl.BlockSpec((pl.Squeezed(), t, tile_d), lambda i, j: (i, 0, j)),
        ],
        out_specs=pl.BlockSpec((pl.Squeezed(), t_out, tile_d),
                               lambda i, j: (i, 0, j)),
        compiler_params=compiler_params,
    )(x)


# ---------------------------------------------------------------------------
# Pure-JAX reference mirroring the PyTorch module exactly
# ---------------------------------------------------------------------------
def reference_padding(x, num_pad=3):
    xt = jnp.swapaxes(x, 0, 1)          # torch.transpose(x, 0, 1)
    pad = xt[0:1]                       # x[0].unsqueeze(0)
    for _ in range(1, num_pad):
        xt = jnp.concatenate([pad, xt], axis=0)
    return jnp.swapaxes(xt, 0, 1)       # transpose back


if __name__ == "__main__":
    key = jax.random.PRNGKey(0)
    k1, k2 = jax.random.split(key)

    fwd = jax.jit(padding_forward, static_argnames="num_pad")

    # small example consistent with the module: batch=2, seq=8, feature=128
    x = jax.random.normal(k1, (2, 8, 128), jnp.float32)
    out = fwd(x, num_pad=3)
    jax.block_until_ready(out)
    assert out.shape == (2, 10, 128)
    np.testing.assert_array_equal(np.asarray(out),
                                  np.asarray(reference_padding(x, num_pad=3)))

    # second shape: feature dim that splits into multiple 128-lane tiles
    x2 = jax.random.normal(k2, (2, 8, 384), jnp.float32)
    out2 = fwd(x2, num_pad=3)
    jax.block_until_ready(out2)
    np.testing.assert_array_equal(np.asarray(out2),
                                  np.asarray(reference_padding(x2, num_pad=3)))

    # degenerate num_pad=1 (identity) path
    out3 = fwd(x, num_pad=1)
    jax.block_until_ready(out3)
    np.testing.assert_array_equal(np.asarray(out3), np.asarray(x))

    print("KERNEL_OK")
</pallas_src>

<mosaic_0001>
module attributes {stable_mosaic.version = 11 : i64} {
  func.func @_padding_kernel(%arg0: i32, %arg1: i32, %arg2: memref<1x8x128xf32, #tpu.memory_space<vmem>>, %arg3: memref<1x10x128xf32, #tpu.memory_space<vmem>>) attributes {dimension_semantics = [#tpu.dimension_semantics<parallel>, #tpu.dimension_semantics<parallel>], iteration_bounds = array<i64: 2, 1>, scalar_prefetch = 0 : i64, scratch_operands = 0 : i64, tpu.core_type = #tpu.core_type<tc>, window_params = [{transform_indices = @transform_0, window_bounds = array<i64: 1, 8, 128>}, {transform_indices = @transform_1, window_bounds = array<i64: 1, 10, 128>}]} {
    %c0 = arith.constant 0 : index
    %c0_0 = arith.constant 0 : index
    %c0_1 = arith.constant 0 : index
    %0 = vector.load %arg2[%c0, %c0_0, %c0_1] : memref<1x8x128xf32, #tpu.memory_space<vmem>>, vector<1x8x128xf32>
    %1 = vector.shape_cast %0 : vector<1x8x128xf32> to vector<8x128xf32>
    %2 = vector.extract_strided_slice %1 {offsets = [0, 0], sizes = [1, 128], strides = [1, 1]} : vector<8x128xf32> to vector<1x128xf32>
    %3 = vector.shape_cast %2 : vector<1x128xf32> to vector<1x128xf32>
    %4 = vector.broadcast %3 : vector<1x128xf32> to vector<2x128xf32>
    %5 = tpu.concatenate %4, %1 in 0 : vector<2x128xf32>, vector<8x128xf32> -> vector<10x128xf32>
    %c0_2 = arith.constant 0 : index
    %c0_3 = arith.constant 0 : index
    %c0_4 = arith.constant 0 : index
    %6 = vector.load %arg3[%c0_2, %c0_3, %c0_4] : memref<1x10x128xf32, #tpu.memory_space<vmem>>, vector<1x10x128xf32>
    %7 = vector.shape_cast %6 : vector<1x10x128xf32> to vector<10x128xf32>
    %8 = vector.shape_cast %5 : vector<10x128xf32> to vector<1x10x128xf32>
    tpu.vector_store %arg3[%c0_2, %c0_3, %c0_4], %8 {strides = array<i32>} : memref<1x10x128xf32, #tpu.memory_space<vmem>>, vector<1x10x128xf32>,
    return
  }
  func.func @transform_0(%arg0: i32, %arg1: i32) -> (i32, i32, i32) {
    %c0_i32 = arith.constant 0 : i32
    %c0_i32_0 = arith.constant 0 : i32
    return %arg0, %c0_i32, %arg1 : i32, i32, i32
  }
  func.func @transform_1(%arg0: i32, %arg1: i32) -> (i32, i32, i32) {
    %c0_i32 = arith.constant 0 : i32
    %c0_i32_0 = arith.constant 0 : i32
    return %arg0, %c0_i32, %arg1 : i32, i32, i32
  }
}

</mosaic_0001>

<llo_original>
// kernel: padding_forward.1
$region0: #{padding_forward.1}
  #allocation0 [shape = 'u32[]', space=smem, size = 0x4, offset = 0x4, fixed_abs, tag = 'smem constant byte address 0x4 - core index']
  #allocation1 [shape = 'u32[144,128]{1,0:T(1,128)}', space=vmem, size = 0x12000, scoped, tag = 'internal scratch']
  %s0 = inlined_call_operand.hbm [shape: f32[2,8,128], index: 0, kind: input, shape index: {}]
  %s1 = inlined_call_operand.vmem [shape: f32[2,10,128], index: 1, kind: output, shape index: {}]
  %s2 = sld [smem:[#allocation0]]
  $region41: #{padding_forward.1} parent=0
    _
  %s4 = ssub.s32 1, %s2
  %s5 = scalar_select 0, %s4, %s2
  $region1: #{padding_forward.1} parent=0
    #allocation2 [shape = 'u8[8192]{0}', space=vmem, size = 0x2000, scoped, tag = 'input window, operand 0']
    #allocation3 [shape = 's32[2]{0}', space=sflag, size = 0x8, scoped, tag = 'scoped memory for padding_forward.1']
    %6 = vsyncpa [#allocation3], 0
    %s7 = scalar_lea.sflag [#allocation3], 1
    %8 = vsyncpa %s7, 0
    loop: start=0, step=1, limit=4
    $region2: #{padding_forward.1} parent=1 // loop_pre_header
      _
    $region3: #{padding_forward.1} parent=1 // loop_header
      %s10 = sphi 0, %s14
      %p11 = scmp.ge.s32.totalorder %s10, 4
      %s17 = sphi 0, %s29
      %s18 = sphi 0, %s25
      %s19 = sphi 0, %s17
      %s20 = sphi 0, %s18
      %s21 = sphi 0, %s19
      %s22 = sphi 0, %s20
      %s34 = sphi 0, %s36
      %s37 = sphi 0, %s34
      %s38 = sphi 0, %s37
      %s54 = sphi 0, %s38
      %s62 = sphi 0, %s64
      %s65 = sphi 0, %s62
      %s66 = sphi 0, %s65
      %s82 = sphi 0, %s66
    $region4: #{padding_forward.1} parent=1 // loop_header_branch
      %13 = sbr.rel (%p11) target = $region8
    $region5: #{padding_forward.1} parent=1 // loop_body
      %s15 = ssub.s32 %s10, 1
      %s16 = ssub.s32 %s10, 2
      %s23 = sadd.s32 1, %s18
      %p24 = scmp.ge.s32.totalorder %s23, 1
      %s25 = scalar_select %p24, 0, %s23
      %s26 = sadd.s32 1, %s17
      %s27 = scalar_select %p24, %s26, %s17
      %p28 = scmp.ge.s32.totalorder %s27, 2
      %s29 = scalar_select %p28, 0, %s27
      %s30 = ssub.s32 %s17, %s29
      %s31 = ssub.s32 %s18, %s25
      %s32 = sor.u32 %s30, %s31
      %p33 = scmp.eq.s32.totalorder %s32, 0
      %s35 = sadd.s32 %s34, 1
      %s36 = scalar_select %p33, %s34, %s35
      %p39 = pneg %p33
      %p40 = scmp.eq.s32.totalorder %s10, 1
      %p41 = por %p39, %p40
      %p42 = scmp.ne.s32.totalorder %s34, %s37
      %p43 = scmp.eq.s32.totalorder %s10, 0
      %p44 = por %p42, %p43
      %p45 = scmp.ne.s32.totalorder %s34, %s37
      %p46 = scmp.eq.s32.totalorder %s15, 1
      %p47 = por %p45, %p46
      %p48 = scmp.ne.s32.totalorder %s37, %s38
      %p49 = scmp.eq.s32.totalorder %s15, 0
      %p50 = por %p48, %p49
      %p51 = scmp.ne.s32.totalorder %s37, %s38
      %p52 = scmp.eq.s32.totalorder %s16, 1
      %p53 = por %p51, %p52
      %p55 = scmp.ne.s32.totalorder %s38, %s54
      %p56 = scmp.eq.s32.totalorder %s16, 0
      %p57 = por %p55, %p56
      %s58 = ssub.s32 %s17, %s29
      %s59 = ssub.s32 %s18, %s25
      %s60 = sor.u32 %s58, %s59
      %p61 = scmp.eq.s32.totalorder %s60, 0
      %s63 = sadd.s32 %s62, 1
      %s64 = scalar_select %p61, %s62, %s63
      %p67 = pneg %p61
      %p68 = scmp.eq.s32.totalorder %s10, 1
      %p69 = por %p67, %p68
      %p70 = scmp.ne.s32.totalorder %s62, %s65
      %p71 = scmp.eq.s32.totalorder %s10, 0
      %p72 = por %p70, %p71
      %p73 = scmp.ne.s32.totalorder %s62, %s65
      %p74 = scmp.eq.s32.totalorder %s15, 1
      %p75 = por %p73, %p74
      %p76 = scmp.ne.s32.totalorder %s65, %s66
      %p77 = scmp.eq.s32.totalorder %s15, 0
      %p78 = por %p76, %p77
      %p79 = scmp.ne.s32.totalorder %s65, %s66
      %p80 = scmp.eq.s32.totalorder %s16, 1
      %p81 = por %p79, %p80
      %p83 = scmp.ne.s32.totalorder %s66, %s82
      %p84 = scmp.eq.s32.totalorder %s16, 0
      %p85 = por %p83, %p84
      %p86 = scmp.le.s32.totalorder 1, %s10
      %p87 = scmp.lt.s32.totalorder %s10, 3
      %p88 = pnand %p86, %p87
      %p89 = pneg %p88
      // Predicated region
      $region9: #{padding_forward.1} parent=5 // pred_check
        _
      $region10: #{padding_forward.1} parent=5 // pred_check_branch
        %91 = sbr.rel (%p88) target = $region12
      $region11: #{padding_forward.1} parent=5 // pred_region
        %s92 = ssub.s32 %s10, 1
      $region12: #{padding_forward.1} parent=5 // pred_fallthru
        _
      %p93 = scmp.lt.s32.totalorder %s10, 2
      // Predicated region
      $region13: #{padding_forward.1} parent=5 // pred_check
        %p94 = pneg %p93
      $region14: #{padding_forward.1} parent=5 // pred_check_branch
        %96 = sbr.rel (%p94) target = $region16
      $region15: #{padding_forward.1} parent=5 // pred_region
        // Predicated region
        $region17: #{padding_forward.1} parent=15 // pred_check
          %p97 = pneg %p44
        $region18: #{padding_forward.1} parent=15 // pred_check_branch
          %99 = sbr.rel (%p97) target = $region20
        $region19: #{padding_forward.1} parent=15 // pred_region
          %s100 = sand.u32 %s34, 1
          %s101 = scalar_lea.sflag [#allocation3], %s100
          %s102 = sand.u32 %s34, 1
          %s103 = smul.addr %s102, 8
          %s104 = scalar_lea.vmem [#allocation2], %s103
          %s106 = ssub.s32 128, 128
          %107 = vsyncadd %s101, %s106
          %s108 = sadd.s32 %s18, %s17
          %s109 = smul.addr %s108, 128
          %s110 = scalar_lea.hbm %s0, %s109
          %s112 = sshll.u32 %s104, 4
          %s113 = int_to_ptr.vmem [resolvable:$true] %s112
          %115 = dma.hbm_to_vmem [thread:$0]  %s110, 128, %s113, %s101
        $region20: #{padding_forward.1} parent=15 // pred_fallthru
          _
      $region16: #{padding_forward.1} parent=5 // pred_fallthru
        _
      %p116 = scmp.le.s32.totalorder 1, %s10
      %p117 = scmp.lt.s32.totalorder %s10, 3
      %p118 = pnand %p116, %p117
      %p119 = pneg %p118
      // Predicated region
      $region21: #{padding_forward.1} parent=5 // pred_check
        _
      $region22: #{padding_forward.1} parent=5 // pred_check_branch
        %121 = sbr.rel (%p118) target = $region24
      $region23: #{padding_forward.1} parent=5 // pred_region
        %s122 = ssub.s32 %s10, 1
        %s123 = sand.u32 %s37, 1
        %s124 = scalar_lea.sflag [#allocation3], %s123
        %s125 = sand.u32 %s37, 1
        %s126 = smul.addr %s125, 8
        %s127 = scalar_lea.vmem [#allocation2], %s126
        // Predicated region
        $region25: #{padding_forward.1} parent=23 // pred_check
          %p128 = pneg %p50
        $region26: #{padding_forward.1} parent=23 // pred_check_branch
          %130 = sbr.rel (%p128) target = $region28
        $region27: #{padding_forward.1} parent=23 // pred_region
          %131 = dma.done %s124, 128
        $region28: #{padding_forward.1} parent=23 // pred_fallthru
          _
        %s132 = sand.u32 %s37, 1
        %s133 = scalar_lea.sflag [#allocation3], %s132
        %s134 = sand.u32 %s37, 1
        %s135 = smul.addr %s134, 8
        %s136 = scalar_lea.vmem [#allocation2], %s135
        %p137 = pneg %p50
        %p138 = pneg %p47
        %p139 = pneg %p78
        %p140 = pneg %p75
        %p141 = scmp.lt.s32.totalorder %s19, 1
        %s142 = scalar_select %p141, %s19, 1
        %p143 = scmp.lt.s32.totalorder %s20, 0
        %s144 = scalar_select %p143, %s20, 0
        %s145 = smul.addr %s142, 2
        %s146 = sadd.s32 %s144, %s145
        %s147 = smul.addr %s146, 8
        %s148 = scalar_lea.vmem %s1, %s147
        %p149 = scmp.lt.s32.totalorder %s19, 1
        %s150 = scalar_select %p149, %s19, 1
        %p151 = scmp.lt.s32.totalorder %s20, 0
        %s152 = scalar_select %p151, %s20, 0
        %s153 = smul.addr %s150, 2
        %s154 = sadd.s32 %s152, %s153
        %s155 = smul.addr %s154, 8
        %s156 = scalar_lea.vmem %s1, %s155
        %v157 = vld [vmem:[%s127] sm:$0xff]
        %v158 = vlaneseq
        %v159 = vshrl.u32 %v158, 7
        %v160 = vsub.s32 0, %v159
        %v161 = vrot.slane %v157, %v160
        %v163 = vrot.slane %v157, 6
        %vm165 = vcmask 1041408
        %v166 = vsel %vm165, %v161, %v163
        %167 = vst [vmem:[%s156] sm:$0xff] %v166
        %168 = vst [vmem:[%s156 + $0x8] sm:$0x3] %v163
        %p169 = scmp.lt.s32.totalorder %s19, 1
        %s170 = scalar_select %p169, %s19, 1
        %p171 = scmp.lt.s32.totalorder %s20, 0
        %s172 = scalar_select %p171, %s20, 0
        %s173 = smul.addr %s170, 2
        %s174 = sadd.s32 %s172, %s173
        %s175 = smul.addr %s174, 8
        %s176 = scalar_lea.vmem %s1, %s175
        // Predicated region
        $region29: #{padding_forward.1} parent=23 // pred_check
          %p177 = pneg %p75
        $region30: #{padding_forward.1} parent=23 // pred_check_branch
          %179 = sbr.rel (%p177) target = $region32
        $region31: #{padding_forward.1} parent=23 // pred_region
          _
        $region32: #{padding_forward.1} parent=23 // pred_fallthru
          _
      $region24: #{padding_forward.1} parent=5 // pred_fallthru
        _
      %p180 = scmp.le.s32.totalorder 2, %s10
      // Predicated region
      $region33: #{padding_forward.1} parent=5 // pred_check
        %p181 = pneg %p180
      $region34: #{padding_forward.1} parent=5 // pred_check_branch
        %183 = sbr.rel (%p181) target = $region36
      $region35: #{padding_forward.1} parent=5 // pred_region
        %s184 = ssub.s32 %s10, 2
        // Predicated region
        $region37: #{padding_forward.1} parent=35 // pred_check
          %p185 = pneg %p81
        $region38: #{padding_forward.1} parent=35 // pred_check_branch
          %187 = sbr.rel (%p185) target = $region40
        $region39: #{padding_forward.1} parent=35 // pred_region
          %p188 = scmp.lt.s32.totalorder %s21, 1
          %s189 = scalar_select %p188, %s21, 1
          %p190 = scmp.lt.s32.totalorder %s22, 0
          %s191 = scalar_select %p190, %s22, 0
          %s192 = smul.addr %s189, 2
          %s193 = sadd.s32 %s191, %s192
          %s194 = smul.addr %s193, 8
          %s195 = scalar_lea.vmem %s1, %s194
        $region40: #{padding_forward.1} parent=35 // pred_fallthru
          _
      $region36: #{padding_forward.1} parent=5 // pred_fallthru
        _
    $region6: #{padding_forward.1} parent=1 // loop_footer
      %s14 = sadd.s32 1, %s10
    $region7: #{padding_forward.1} parent=1 // loop_footer_branch
      %9 = sbr.rel target = $region3
    $region8: #{padding_forward.1} parent=1 // loop_exit
      _
    %196 = vsyncpa [#allocation3], 1
    %s197 = scalar_lea.sflag [#allocation3], 1
    %198 = vsyncpa %s197, 1

</llo_original>
